<compile_context>
chip_gen: v6e
topology: v6e:2x2x1
jax: 0.10.0
libtpu: 0.0.40
codegen_flags: <defaults>
</compile_context>

<pallas_src>
import math
import functools

import jax
import jax.numpy as jnp
from jax.experimental import pallas as pl
from jax.experimental.pallas import tpu as pltpu

BLOCK_SIZE = 128  # module default


# --------------------------------------------------------------------------- #
# Kernel
# --------------------------------------------------------------------------- #
def _fused_attention_kernel(q_ref, k_ref, v_ref, mask_ref, o_ref, *,
                            scale, neg, is_causal, merge_heads,
                            mxu_dtype, approx_recip):
    # q/k/v refs: (Nb, Hb, t, d) tile for Nb batches x Hb heads.
    # mask_ref:   (Nb, 1, 1, t) additive padding mask (not re-DMA'd across heads).
    nb, hb, t, d = q_ref.shape

    if is_causal:
        # build_causal_mask semantics: pad + triangular(min) clamped at finfo.min
        row = jax.lax.broadcasted_iota(jnp.int32, (t, t), 0)
        col = jax.lax.broadcasted_iota(jnp.int32, (t, t), 1)
        tri = col <= row                      # built once, reused for every batch

    for b in range(nb):                       # static unroll over folded batches
        q = q_ref[b]                          # (Hb, t, d)
        k = k_ref[b]
        v = v_ref[b]
        pad = mask_ref[b, 0].astype(jnp.float32)                        # (1, t)
        if is_causal:
            bias = jnp.where(tri, jnp.broadcast_to(pad, (t, t)), neg)   # (t, t)
        else:
            bias = pad                                                  # (1, t)

        # scale Q (t*d multiplies) instead of the (t,t) scores; feed the MXU in
        # mxu_dtype (bf16 fast path) with fp32 accumulation.
        qs = (q * scale).astype(mxu_dtype)

        # scores = Q K^T: contraction on the last dims (no explicit transpose).
        s = jnp.einsum('htd,hsd->hts', qs, k.astype(mxu_dtype),
                       preferred_element_type=jnp.float32)              # (Hb, t, t)
        s = s + bias

        # numerically-stable softmax (fp32); approx reciprocal uses the EUP slot
        s = s - jnp.max(s, axis=-1, keepdims=True)
        p = jnp.exp(s)
        p = p * pl.reciprocal(jnp.sum(p, axis=-1, keepdims=True),
                              approx=approx_recip)

        # context = probs @ V (dropout is identity in eval mode)
        ctx = jnp.einsum('hts,hsd->htd', p.astype(mxu_dtype), v.astype(mxu_dtype),
                         preferred_element_type=jnp.float32)            # (Hb, t, d)

        if merge_heads:
            # lane-dense merged-heads writeback via per-head static-slice stores
            # (no jnp.concatenate copies in the epilogue)
            for i in range(hb):
                o_ref[b, :, i * d:(i + 1) * d] = ctx[i].astype(o_ref.dtype)
        else:
            o_ref[b] = ctx.astype(o_ref.dtype)


# --------------------------------------------------------------------------- #
# Generation-aware tiling
# --------------------------------------------------------------------------- #
@functools.lru_cache(maxsize=1)
def _vmem_budgets():
    """Returns (per-step tile budget, vmem_limit_bytes, two_tensorcores)."""
    cap = 128 << 20
    try:
        cap = int(pltpu.get_tpu_info().vmem_capacity_bytes)
    except Exception:
        pass
    if cap <= (64 << 20):
        # v7x-class: 64 MiB VMEM per TensorCore, 2 TensorCores per chip.
        return (28 << 20, 44 << 20, True)
    # v5e / v6e: 128 MiB physical VMEM, 1 TensorCore.
    return (60 << 20, 96 << 20, False)


def _tile_bytes(nb, hb, t, d, itemsize, bufs):
    """Per-step VMEM estimate: pipelined I/O tiles + in-kernel intermediates."""
    io = bufs * (4 * nb * hb * t * d + nb * t) * itemsize   # Q, K, V, O, mask buffers
    inter = (nb * (hb * t * t * (4 + 4 + 2)                 # f32 scores + exp + probs copy
                   + hb * t * d * (4 + 2 + 2))              # f32 ctx + cast staging
             + t * t * 4)                                   # causal bias / tri
    return io + inter


def _choose_tiling(n, h, t, d, itemsize, merge_heads, tile_budget, two_cores,
                   heads_per_block=None, batches_per_block=None):
    """Pick (batches, heads) per grid step: biggest tile that fits the budget,
    keeping an even step count on 2-TensorCore chips, plus a buffer count."""
    forced_hb = heads_per_block is not None
    forced_nb = batches_per_block is not None

    head_divs = ([heads_per_block] if forced_hb
                 else [x for x in range(1, h + 1) if h % x == 0])
    if merge_heads and not forced_hb:
        legal = [x for x in head_divs if (x * d) % 128 == 0 or x == h]
        head_divs = legal if legal else [h]
    batch_divs = ([batches_per_block] if forced_nb
                  else [x for x in range(1, n + 1) if n % x == 0])

    cands = []
    for hb in head_divs:
        nb_options = batch_divs if (forced_nb or hb == h) else [1]
        for nb in nb_options:
            b2 = _tile_bytes(nb, hb, t, d, itemsize, 2)
            steps = (n // nb) * (h // hb)
            cands.append((b2 <= tile_budget, nb, hb, b2, steps))

    fitting = [c for c in cands if c[0]]
    if fitting:
        def score(c):
            _, nb, hb, b2, steps = c
            balanced = (steps % 2 == 0) if two_cores else True
            return (balanced, b2)
        _, nb, hb, b2, steps = max(fitting, key=score)
    else:
        # nothing fits the estimate: take the smallest tile (never the largest)
        _, nb, hb, b2, steps = min(cands, key=lambda c: c[3])

    # Third pipeline buffer only when there are enough steps, the tile is large
    # enough to be DMA-bound, and the extra buffer still fits the budget.
    bufs = 2
    if (steps >= 3 and b2 >= (1 << 20)
            and _tile_bytes(nb, hb, t, d, itemsize, 3) <= tile_budget):
        bufs = 3
    return nb, hb, bufs


def _make_qkv_spec(shape, index_map, bufs):
    if bufs > 2:
        try:
            return pl.BlockSpec(shape, index_map, pipeline_mode=pl.Buffered(bufs))
        except TypeError:   # pipeline_mode kwarg unavailable -> default buffering
            pass
    return pl.BlockSpec(shape, index_map)


# --------------------------------------------------------------------------- #
# Wrapper
# --------------------------------------------------------------------------- #
@functools.partial(jax.jit, static_argnames=(
    "is_causal", "merge_heads", "precise", "heads_per_block", "batches_per_block"))
def lsg_self_attention(query_layer, key_layer, value_layer, attention_mask=None,
                       is_causal=False, merge_heads=False, precise=False,
                       heads_per_block=None, batches_per_block=None):
    """
    query/key/value: (batch, num_heads, seq, head_dim)
    attention_mask:  (batch, 1, 1, seq) additive mask or None
    Returns (batch, num_heads, seq, head_dim), or (batch, seq, num_heads*head_dim)
    if merge_heads=True (lane-dense merged-heads layout; recommended when
    head_dim < 128).  precise=True keeps fp32 MXU inputs and exact reciprocal.
    Only the t <= 2*block_size path of BaseLSGSelfAttention.forward is supported.
    """
    n, h, t, d = query_layer.shape
    dtype = query_layer.dtype
    assert t <= 2 * BLOCK_SIZE, "long-sequence LSG path is abstract in the base class"

    if attention_mask is None:
        attention_mask = jnp.zeros((n, 1, 1, t), dtype=dtype)
    assert attention_mask.ndim == 4 and attention_mask.shape[-2] == 1, \
        "Mask must be (batch, 1, 1, sequence_length)"

    itemsize = jnp.dtype(dtype).itemsize
    tile_budget, vmem_limit, two_cores = _vmem_budgets()
    nb, hb, bufs = _choose_tiling(n, h, t, d, itemsize, merge_heads, tile_budget,
                                  two_cores, heads_per_block, batches_per_block)
    assert h % hb == 0 and n % nb == 0
    if merge_heads:
        assert (hb * d) % 128 == 0 or hb == h, \
            "merged-heads block minor dim must be 128-aligned or cover all heads"

    scale = 1.0 / math.sqrt(d)            # Python float -> stays weak-typed
    neg = float(jnp.finfo(dtype).min)
    mxu_dtype = dtype if (precise or dtype != jnp.float32) else jnp.bfloat16

    kernel = functools.partial(
        _fused_attention_kernel, scale=scale, neg=neg, is_causal=is_causal,
        merge_heads=merge_heads, mxu_dtype=mxu_dtype, approx_recip=not precise)

    qkv_spec = _make_qkv_spec((nb, hb, t, d), lambda b, g: (b, g, 0, 0), bufs)
    # tiny padding-mask block; index constant across the (fast) head-group axis
    mask_spec = pl.BlockSpec((nb, 1, 1, t), lambda b, g: (b, 0, 0, 0))

    if merge_heads:
        out_shape = jax.ShapeDtypeStruct((n, t, h * d), dtype)
        out_spec = pl.BlockSpec((nb, t, hb * d), lambda b, g: (b, 0, g))
    else:
        out_shape = jax.ShapeDtypeStruct((n, h, t, d), dtype)
        out_spec = pl.BlockSpec((nb, hb, t, d), lambda b, g: (b, g, 0, 0))

    return pl.pallas_call(
        kernel,
        out_shape=out_shape,
        grid_spec=pltpu.PrefetchScalarGridSpec(
            num_scalar_prefetch=0,
            grid=(n // nb, h // hb),
            in_specs=[qkv_spec, qkv_spec, qkv_spec, mask_spec],
            out_specs=out_spec,
        ),
        compiler_params=pltpu.CompilerParams(
            dimension_semantics=("parallel", "parallel"),
            vmem_limit_bytes=vmem_limit),
    )(query_layer, key_layer, value_layer, attention_mask)


# --------------------------------------------------------------------------- #
# Pure-JAX reference (BaseLSGSelfAttention.attention_product semantics)
# --------------------------------------------------------------------------- #
def _reference(q, k, v, mask, is_causal=False):
    n, h, t, d = q.shape
    f32 = jnp.float32
    q32, k32, v32 = q.astype(f32), k.astype(f32), v.astype(f32)
    if mask is None:
        mask = jnp.zeros((n, 1, 1, t), dtype=q.dtype)
    m = mask.astype(f32)
    if is_causal:
        neg = float(jnp.finfo(q.dtype).min)
        tri = jnp.where(jnp.arange(t)[None, :] <= jnp.arange(t)[:, None],
                        0.0, neg).astype(f32)
        m = m + tri[None, None]
        m = jnp.maximum(m, neg)
    s = jnp.einsum('nhqd,nhkd->nhqk', q32, k32) / math.sqrt(d) + m
    p = jax.nn.softmax(s, axis=-1)
    return jnp.einsum('nhqk,nhkd->nhqd', p, v32)


if __name__ == "__main__":
    key = jax.random.PRNGKey(0)
    n, h, t, d = 2, 4, 8, 32  # batch, heads, seq (<= 2*block_size), head_dim
    kq, kk, kv = jax.random.split(key, 3)

    q = jax.random.normal(kq, (n, h, t, d), dtype=jnp.float32)
    k = jax.random.normal(kk, (n, h, t, d), dtype=jnp.float32)
    v = jax.random.normal(kv, (n, h, t, d), dtype=jnp.float32)

    # additive padding mask: last two tokens of batch 1 are masked out
    pad = jnp.zeros((n, 1, 1, t), dtype=jnp.float32)
    pad = pad.at[1, 0, 0, -2:].set(jnp.finfo(jnp.float32).min)

    ref = _reference(q, k, v, pad, is_causal=False)

    # 1) fp32 storage, default fast mode (bf16 MXU + approx reciprocal)
    out = jax.block_until_ready(lsg_self_attention(q, k, v, pad))
    assert out.shape == (n, h, t, d)
    assert jnp.allclose(out, ref, atol=3e-2, rtol=3e-2), "fast fp32 mismatch"

    # 2) fp32 strict mode (fp32 MXU, exact reciprocal)
    out_p = jax.block_until_ready(lsg_self_attention(q, k, v, pad, precise=True))
    assert jnp.allclose(out_p, ref, atol=1e-4, rtol=1e-4), "precise fp32 mismatch"

    # 3) causal (in-kernel triangular mask), strict mode
    out_c = jax.block_until_ready(
        lsg_self_attention(q, k, v, pad, is_causal=True, precise=True))
    ref_c = _reference(q, k, v, pad, is_causal=True)
    assert jnp.allclose(out_c, ref_c, atol=1e-4, rtol=1e-4), "causal mismatch"

    # 4) lane-dense merged-heads output layout (n, t, h*d), strict mode
    out_m = jax.block_until_ready(
        lsg_self_attention(q, k, v, pad, merge_heads=True, precise=True))
    ref_m = jnp.transpose(ref, (0, 2, 1, 3)).reshape(n, t, h * d)
    assert out_m.shape == (n, t, h * d)
    assert jnp.allclose(out_m, ref_m, atol=1e-4, rtol=1e-4), "merged-heads mismatch"

    # 5) bf16 storage -> bf16 MXU path with fp32 accumulation
    qb, kb, vb = (x.astype(jnp.bfloat16) for x in (q, k, v))
    padb = jnp.zeros((n, 1, 1, t), dtype=jnp.bfloat16)
    padb = padb.at[1, 0, 0, -2:].set(jnp.finfo(jnp.bfloat16).min)
    out_b = jax.block_until_ready(lsg_self_attention(qb, kb, vb, padb))
    ref_b = _reference(qb, kb, vb, padb, is_causal=False)
    assert jnp.allclose(out_b.astype(jnp.float32), ref_b, atol=7e-2, rtol=7e-2), \
        "bf16 mismatch"

    # 6) forced small head-group (multi-step grid exercises the index maps)
    out_g = jax.block_until_ready(
        lsg_self_attention(q, k, v, pad, precise=True, heads_per_block=1))
    assert jnp.allclose(out_g, ref, atol=1e-4, rtol=1e-4), "multi-group mismatch"

    print("KERNEL_OK")
</pallas_src>

<mosaic_0001>
module attributes {stable_mosaic.version = 11 : i64} {
  func.func @_fused_attention_kernel(%arg0: i32, %arg1: i32, %arg2: memref<2x4x8x32xf32, #tpu.memory_space<vmem>>, %arg3: memref<2x4x8x32xf32, #tpu.memory_space<vmem>>, %arg4: memref<2x4x8x32xf32, #tpu.memory_space<vmem>>, %arg5: memref<2x1x1x8xf32, #tpu.memory_space<vmem>>, %arg6: memref<2x4x8x32xf32, #tpu.memory_space<vmem>>) attributes {dimension_semantics = [#tpu.dimension_semantics<parallel>, #tpu.dimension_semantics<parallel>], iteration_bounds = array<i64: 1, 1>, scalar_prefetch = 0 : i64, scratch_operands = 0 : i64, tpu.core_type = #tpu.core_type<tc>, window_params = [{transform_indices = @transform_0, window_bounds = array<i64: 2, 4, 8, 32>}, {transform_indices = @transform_1, window_bounds = array<i64: 2, 4, 8, 32>}, {transform_indices = @transform_2, window_bounds = array<i64: 2, 4, 8, 32>}, {transform_indices = @transform_3, window_bounds = array<i64: 2, 1, 1, 8>}, {transform_indices = @transform_4, window_bounds = array<i64: 2, 4, 8, 32>}]} {
    %c0 = arith.constant 0 : index
    %c0_0 = arith.constant 0 : index
    %c0_1 = arith.constant 0 : index
    %c0_2 = arith.constant 0 : index
    %0 = vector.load %arg2[%c0, %c0_0, %c0_1, %c0_2] : memref<2x4x8x32xf32, #tpu.memory_space<vmem>>, vector<1x4x8x32xf32>
    %1 = vector.shape_cast %0 : vector<1x4x8x32xf32> to vector<4x8x32xf32>
    %c0_3 = arith.constant 0 : index
    %c0_4 = arith.constant 0 : index
    %c0_5 = arith.constant 0 : index
    %c0_6 = arith.constant 0 : index
    %2 = vector.load %arg3[%c0_3, %c0_4, %c0_5, %c0_6] : memref<2x4x8x32xf32, #tpu.memory_space<vmem>>, vector<1x4x8x32xf32>
    %3 = vector.shape_cast %2 : vector<1x4x8x32xf32> to vector<4x8x32xf32>
    %c0_7 = arith.constant 0 : index
    %c0_8 = arith.constant 0 : index
    %c0_9 = arith.constant 0 : index
    %c0_10 = arith.constant 0 : index
    %4 = vector.load %arg4[%c0_7, %c0_8, %c0_9, %c0_10] : memref<2x4x8x32xf32, #tpu.memory_space<vmem>>, vector<1x4x8x32xf32>
    %5 = vector.shape_cast %4 : vector<1x4x8x32xf32> to vector<4x8x32xf32>
    %c0_11 = arith.constant 0 : index
    %c0_12 = arith.constant 0 : index
    %c0_13 = arith.constant 0 : index
    %c0_14 = arith.constant 0 : index
    %6 = vector.load %arg5[%c0_11, %c0_12, %c0_13, %c0_14] : memref<2x1x1x8xf32, #tpu.memory_space<vmem>>, vector<1x1x1x8xf32>
    %7 = vector.shape_cast %6 : vector<1x1x1x8xf32> to vector<1x8xf32>
    %cst = arith.constant 0.176776692 : f32
    %8 = vector.broadcast %cst : f32 to vector<4x8x32xf32>
    %9 = arith.mulf %1, %8 : vector<4x8x32xf32>
    %10 = arith.truncf %9 : vector<4x8x32xf32> to vector<4x8x32xbf16>
    %11 = arith.truncf %3 : vector<4x8x32xf32> to vector<4x8x32xbf16>
    "tpu.trace_start"() <{level = 10 : i32, message = "htd,hsd->hts"}> : () -> ()
    %cst_15 = arith.constant dense<0.000000e+00> : vector<4x8x8xf32>
    %12 = tpu.matmul %10, %11, %cst_15 {dimension_numbers = #tpu.dot_dimension_numbers<[2], [2], [1], [1], [0, 0, 0, 1, 1, 1], [0], [0]>} : vector<4x8x32xbf16>, vector<4x8x32xbf16>, vector<4x8x8xf32> -> vector<4x8x8xf32>
    "tpu.trace_stop"() : () -> ()
    %13 = vector.shape_cast %7 : vector<1x8xf32> to vector<1x1x8xf32>
    %14 = vector.broadcast %13 : vector<1x1x8xf32> to vector<4x8x8xf32>
    %15 = arith.addf %12, %14 : vector<4x8x8xf32>
    %cst_16 = arith.constant dense<0xFF800000> : vector<4x8xf32>
    %16 = vector.multi_reduction <maximumf>, %15, %cst_16 [2] : vector<4x8x8xf32> to vector<4x8xf32>
    %17 = vector.shape_cast %16 : vector<4x8xf32> to vector<4x8x1xf32>
    %18 = vector.broadcast %17 : vector<4x8x1xf32> to vector<4x8x8xf32>
    %19 = arith.subf %15, %18 : vector<4x8x8xf32>
    %20 = math.exp %19 : vector<4x8x8xf32>
    %cst_17 = arith.constant dense<0.000000e+00> : vector<4x8xf32>
    %21 = vector.multi_reduction <add>, %20, %cst_17 [2] : vector<4x8x8xf32> to vector<4x8xf32>
    %22 = vector.shape_cast %21 : vector<4x8xf32> to vector<4x8x1xf32>
    %23 = tpu.reciprocal %22 {approx = true} : vector<4x8x1xf32> -> vector<4x8x1xf32>
    %24 = vector.broadcast %23 : vector<4x8x1xf32> to vector<4x8x8xf32>
    %25 = arith.mulf %20, %24 : vector<4x8x8xf32>
    %26 = arith.truncf %25 : vector<4x8x8xf32> to vector<4x8x8xbf16>
    %27 = arith.truncf %5 : vector<4x8x32xf32> to vector<4x8x32xbf16>
    "tpu.trace_start"() <{level = 10 : i32, message = "hts,hsd->htd"}> : () -> ()
    %cst_18 = arith.constant dense<0.000000e+00> : vector<4x8x32xf32>
    %28 = tpu.matmul %26, %27, %cst_18 {dimension_numbers = #tpu.dot_dimension_numbers<[2], [1], [1], [2], [0, 0, 0, 1, 1, 2], [0], [0]>} : vector<4x8x8xbf16>, vector<4x8x32xbf16>, vector<4x8x32xf32> -> vector<4x8x32xf32>
    "tpu.trace_stop"() : () -> ()
    %c0_19 = arith.constant 0 : index
    %c0_20 = arith.constant 0 : index
    %c0_21 = arith.constant 0 : index
    %c0_22 = arith.constant 0 : index
    %29 = vector.load %arg6[%c0_19, %c0_20, %c0_21, %c0_22] : memref<2x4x8x32xf32, #tpu.memory_space<vmem>>, vector<1x4x8x32xf32>
    %30 = vector.shape_cast %29 : vector<1x4x8x32xf32> to vector<4x8x32xf32>
    %31 = vector.shape_cast %28 : vector<4x8x32xf32> to vector<1x4x8x32xf32>
    tpu.vector_store %arg6[%c0_19, %c0_20, %c0_21, %c0_22], %31 {strides = array<i32>} : memref<2x4x8x32xf32, #tpu.memory_space<vmem>>, vector<1x4x8x32xf32>,
    %c1 = arith.constant 1 : index
    %c0_23 = arith.constant 0 : index
    %c0_24 = arith.constant 0 : index
    %c0_25 = arith.constant 0 : index
    %32 = vector.load %arg2[%c1, %c0_23, %c0_24, %c0_25] : memref<2x4x8x32xf32, #tpu.memory_space<vmem>>, vector<1x4x8x32xf32>
    %33 = vector.shape_cast %32 : vector<1x4x8x32xf32> to vector<4x8x32xf32>
    %c1_26 = arith.constant 1 : index
    %c0_27 = arith.constant 0 : index
    %c0_28 = arith.constant 0 : index
    %c0_29 = arith.constant 0 : index
    %34 = vector.load %arg3[%c1_26, %c0_27, %c0_28, %c0_29] : memref<2x4x8x32xf32, #tpu.memory_space<vmem>>, vector<1x4x8x32xf32>
    %35 = vector.shape_cast %34 : vector<1x4x8x32xf32> to vector<4x8x32xf32>
    %c1_30 = arith.constant 1 : index
    %c0_31 = arith.constant 0 : index
    %c0_32 = arith.constant 0 : index
    %c0_33 = arith.constant 0 : index
    %36 = vector.load %arg4[%c1_30, %c0_31, %c0_32, %c0_33] : memref<2x4x8x32xf32, #tpu.memory_space<vmem>>, vector<1x4x8x32xf32>
    %37 = vector.shape_cast %36 : vector<1x4x8x32xf32> to vector<4x8x32xf32>
    %c1_34 = arith.constant 1 : index
    %c0_35 = arith.constant 0 : index
    %c0_36 = arith.constant 0 : index
    %c0_37 = arith.constant 0 : index
    %38 = vector.load %arg5[%c1_34, %c0_35, %c0_36, %c0_37] : memref<2x1x1x8xf32, #tpu.memory_space<vmem>>, vector<1x1x1x8xf32>
    %39 = vector.shape_cast %38 : vector<1x1x1x8xf32> to vector<1x8xf32>
    %cst_38 = arith.constant 0.176776692 : f32
    %40 = vector.broadcast %cst_38 : f32 to vector<4x8x32xf32>
    %41 = arith.mulf %33, %40 : vector<4x8x32xf32>
    %42 = arith.truncf %41 : vector<4x8x32xf32> to vector<4x8x32xbf16>
    %43 = arith.truncf %35 : vector<4x8x32xf32> to vector<4x8x32xbf16>
    "tpu.trace_start"() <{level = 10 : i32, message = "htd,hsd->hts"}> : () -> ()
    %cst_39 = arith.constant dense<0.000000e+00> : vector<4x8x8xf32>
    %44 = tpu.matmul %42, %43, %cst_39 {dimension_numbers = #tpu.dot_dimension_numbers<[2], [2], [1], [1], [0, 0, 0, 1, 1, 1], [0], [0]>} : vector<4x8x32xbf16>, vector<4x8x32xbf16>, vector<4x8x8xf32> -> vector<4x8x8xf32>
    "tpu.trace_stop"() : () -> ()
    %45 = vector.shape_cast %39 : vector<1x8xf32> to vector<1x1x8xf32>
    %46 = vector.broadcast %45 : vector<1x1x8xf32> to vector<4x8x8xf32>
    %47 = arith.addf %44, %46 : vector<4x8x8xf32>
    %cst_40 = arith.constant dense<0xFF800000> : vector<4x8xf32>
    %48 = vector.multi_reduction <maximumf>, %47, %cst_40 [2] : vector<4x8x8xf32> to vector<4x8xf32>
    %49 = vector.shape_cast %48 : vector<4x8xf32> to vector<4x8x1xf32>
    %50 = vector.broadcast %49 : vector<4x8x1xf32> to vector<4x8x8xf32>
    %51 = arith.subf %47, %50 : vector<4x8x8xf32>
    %52 = math.exp %51 : vector<4x8x8xf32>
    %cst_41 = arith.constant dense<0.000000e+00> : vector<4x8xf32>
    %53 = vector.multi_reduction <add>, %52, %cst_41 [2] : vector<4x8x8xf32> to vector<4x8xf32>
    %54 = vector.shape_cast %53 : vector<4x8xf32> to vector<4x8x1xf32>
    %55 = tpu.reciprocal %54 {approx = true} : vector<4x8x1xf32> -> vector<4x8x1xf32>
    %56 = vector.broadcast %55 : vector<4x8x1xf32> to vector<4x8x8xf32>
    %57 = arith.mulf %52, %56 : vector<4x8x8xf32>
    %58 = arith.truncf %57 : vector<4x8x8xf32> to vector<4x8x8xbf16>
    %59 = arith.truncf %37 : vector<4x8x32xf32> to vector<4x8x32xbf16>
    "tpu.trace_start"() <{level = 10 : i32, message = "hts,hsd->htd"}> : () -> ()
    %cst_42 = arith.constant dense<0.000000e+00> : vector<4x8x32xf32>
    %60 = tpu.matmul %58, %59, %cst_42 {dimension_numbers = #tpu.dot_dimension_numbers<[2], [1], [1], [2], [0, 0, 0, 1, 1, 2], [0], [0]>} : vector<4x8x8xbf16>, vector<4x8x32xbf16>, vector<4x8x32xf32> -> vector<4x8x32xf32>
    "tpu.trace_stop"() : () -> ()
    %c1_43 = arith.constant 1 : index
    %c0_44 = arith.constant 0 : index
    %c0_45 = arith.constant 0 : index
    %c0_46 = arith.constant 0 : index
    %61 = vector.load %arg6[%c1_43, %c0_44, %c0_45, %c0_46] : memref<2x4x8x32xf32, #tpu.memory_space<vmem>>, vector<1x4x8x32xf32>
    %62 = vector.shape_cast %61 : vector<1x4x8x32xf32> to vector<4x8x32xf32>
    %63 = vector.shape_cast %60 : vector<4x8x32xf32> to vector<1x4x8x32xf32>
    tpu.vector_store %arg6[%c1_43, %c0_44, %c0_45, %c0_46], %63 {strides = array<i32>} : memref<2x4x8x32xf32, #tpu.memory_space<vmem>>, vector<1x4x8x32xf32>,
    return
  }
  func.func @transform_0(%arg0: i32, %arg1: i32) -> (i32, i32, i32, i32) {
    %c0_i32 = arith.constant 0 : i32
    %c0_i32_0 = arith.constant 0 : i32
    %c0_i32_1 = arith.constant 0 : i32
    return %arg0, %arg1, %c0_i32, %c0_i32_0 : i32, i32, i32, i32
  }
  func.func @transform_1(%arg0: i32, %arg1: i32) -> (i32, i32, i32, i32) {
    %c0_i32 = arith.constant 0 : i32
    %c0_i32_0 = arith.constant 0 : i32
    %c0_i32_1 = arith.constant 0 : i32
    return %arg0, %arg1, %c0_i32, %c0_i32_0 : i32, i32, i32, i32
  }
  func.func @transform_2(%arg0: i32, %arg1: i32) -> (i32, i32, i32, i32) {
    %c0_i32 = arith.constant 0 : i32
    %c0_i32_0 = arith.constant 0 : i32
    %c0_i32_1 = arith.constant 0 : i32
    return %arg0, %arg1, %c0_i32, %c0_i32_0 : i32, i32, i32, i32
  }
  func.func @transform_3(%arg0: i32, %arg1: i32) -> (i32, i32, i32, i32) {
    %c0_i32 = arith.constant 0 : i32
    %c0_i32_0 = arith.constant 0 : i32
    %c0_i32_1 = arith.constant 0 : i32
    %c0_i32_2 = arith.constant 0 : i32
    return %arg0, %c0_i32, %c0_i32_0, %c0_i32_1 : i32, i32, i32, i32
  }
  func.func @transform_4(%arg0: i32, %arg1: i32) -> (i32, i32, i32, i32) {
    %c0_i32 = arith.constant 0 : i32
    %c0_i32_0 = arith.constant 0 : i32
    %c0_i32_1 = arith.constant 0 : i32
    return %arg0, %arg1, %c0_i32, %c0_i32_0 : i32, i32, i32, i32
  }
}

</mosaic_0001>

<llo_original>
// kernel: lsg_self_attention.1
$region0: #{lsg_self_attention.1}
  #allocation0 [shape = 'u32[]', space=smem, size = 0x4, offset = 0x4, fixed_abs, tag = 'smem constant byte address 0x4 - core index']
  #allocation1 [shape = 'u32[144,128]{1,0:T(1,128)}', space=vmem, size = 0x12000, scoped, tag = 'internal scratch']
  %s0 = inlined_call_operand.hbm [shape: f32[2,4,8,32], index: 0, kind: input, shape index: {}]
  %s1 = inlined_call_operand.hbm [shape: f32[2,4,8,32], index: 1, kind: input, shape index: {}]
  %s2 = inlined_call_operand.hbm [shape: f32[2,4,8,32], index: 2, kind: input, shape index: {}]
  %s3 = inlined_call_operand.vmem [shape: f32[2,1,1,8], index: 3, kind: input, shape index: {}]
  %s4 = inlined_call_operand.hbm [shape: f32[2,4,8,32], index: 4, kind: output, shape index: {}]
  %s5 = sld [smem:[#allocation0]]
  $region38: #{lsg_self_attention.1} parent=0
    _
  %s7 = ssub.s32 1, %s5
  %s8 = scalar_select 0, %s7, %s5
  $region1: #{lsg_self_attention.1} parent=0
    #allocation2 [shape = 'u8[32768]{0}', space=vmem, size = 0x8000, scoped, tag = 'input window, operand 0, single buffered']
    #allocation3 [shape = 's32[1]{0}', space=sflag, size = 0x4, scoped, tag = 'scoped memory for lsg_self_attention.1']
    #allocation4 [shape = 's32[1]{0}', space=sflag, size = 0x4, scoped, tag = 'scoped memory for lsg_self_attention.1']
    #allocation5 [shape = 'u8[32768]{0}', space=vmem, size = 0x8000, scoped, tag = 'input window, operand 1, single buffered']
    #allocation6 [shape = 's32[1]{0}', space=sflag, size = 0x4, scoped, tag = 'scoped memory for lsg_self_attention.1']
    #allocation7 [shape = 'u8[32768]{0}', space=vmem, size = 0x8000, scoped, tag = 'input window, operand 2, single buffered']
    #allocation8 [shape = 'u8[32768]{0}', space=vmem, size = 0x8000, scoped, tag = 'output window, operand 0, single buffered']
    %9 = vsyncpa [#allocation3], 0
    %10 = vsyncpa [#allocation6], 0
    %11 = vsyncpa [#allocation4], 0
    // Predicated region
    $region2: #{lsg_self_attention.1} parent=1 // pred_check
      _
    $region3: #{lsg_self_attention.1} parent=1 // pred_check_branch
      %13 = sbr.rel (0) target = $region5
    $region4: #{lsg_self_attention.1} parent=1 // pred_region
      %s15 = ssub.s32 1024, 1024
      %16 = vsyncadd [#allocation3], %s15
      %s17 = sshll.u32 [#allocation2], 4
      %s18 = int_to_ptr.vmem [resolvable:$true] %s17
      %23 = dma.hbm_to_vmem [thread:$0]  %s0, 1024, %s18, [#allocation3], 128, 128, 8
    $region5: #{lsg_self_attention.1} parent=1 // pred_fallthru
      _
    // Predicated region
    $region6: #{lsg_self_attention.1} parent=1 // pred_check
      _
    $region7: #{lsg_self_attention.1} parent=1 // pred_check_branch
      %25 = sbr.rel (0) target = $region9
    $region8: #{lsg_self_attention.1} parent=1 // pred_region
      %s27 = ssub.s32 1024, 1024
      %28 = vsyncadd [#allocation6], %s27
      %s29 = sshll.u32 [#allocation5], 4
      %s30 = int_to_ptr.vmem [resolvable:$true] %s29
      %35 = dma.hbm_to_vmem [thread:$0]  %s1, 1024, %s30, [#allocation6], 128, 128, 8
    $region9: #{lsg_self_attention.1} parent=1 // pred_fallthru
      _
    // Predicated region
    $region10: #{lsg_self_attention.1} parent=1 // pred_check
      _
    $region11: #{lsg_self_attention.1} parent=1 // pred_check_branch
      %37 = sbr.rel (0) target = $region13
    $region12: #{lsg_self_attention.1} parent=1 // pred_region
      %s39 = ssub.s32 1024, 1024
      %40 = vsyncadd [#allocation6], %s39
      %s41 = sshll.u32 [#allocation7], 4
      %s42 = int_to_ptr.vmem [resolvable:$true] %s41
      %47 = dma.hbm_to_vmem [thread:$0]  %s2, 1024, %s42, [#allocation6], 128, 128, 8
    $region13: #{lsg_self_attention.1} parent=1 // pred_fallthru
      _
    // Predicated region
    $region14: #{lsg_self_attention.1} parent=1 // pred_check
      _
    $region15: #{lsg_self_attention.1} parent=1 // pred_check_branch
      %49 = sbr.rel (0) target = $region17
    $region16: #{lsg_self_attention.1} parent=1 // pred_region
      _
    $region17: #{lsg_self_attention.1} parent=1 // pred_fallthru
      _
    // Predicated region
    $region18: #{lsg_self_attention.1} parent=1 // pred_check
      _
    $region19: #{lsg_self_attention.1} parent=1 // pred_check_branch
      %51 = sbr.rel (0) target = $region21
    $region20: #{lsg_self_attention.1} parent=1 // pred_region
      %52 = dma.done [#allocation3], 1024
    $region21: #{lsg_self_attention.1} parent=1 // pred_fallthru
      _
    // Predicated region
    $region22: #{lsg_self_attention.1} parent=1 // pred_check
      _
    $region23: #{lsg_self_attention.1} parent=1 // pred_check_branch
      %54 = sbr.rel (0) target = $region25
    $region24: #{lsg_self_attention.1} parent=1 // pred_region
      %55 = dma.done [#allocation6], 1024
    $region25: #{lsg_self_attention.1} parent=1 // pred_fallthru
      _
    // Predicated region
    $region26: #{lsg_self_attention.1} parent=1 // pred_check
      _
    $region27: #{lsg_self_attention.1} parent=1 // pred_check_branch
      %57 = sbr.rel (0) target = $region29
    $region28: #{lsg_self_attention.1} parent=1 // pred_region
      %58 = dma.done [#allocation6], 1024
    $region29: #{lsg_self_attention.1} parent=1 // pred_fallthru
      _
    %v60 = vld [vmem:[#allocation2] sm:$0xff]
    %v61 = vld [vmem:[#allocation2 + $0x8] sm:$0xff]
    %v62 = vld [vmem:[#allocation2 + $0x10] sm:$0xff]
    %v63 = vld [vmem:[#allocation2 + $0x18] sm:$0xff]
    %v64 = vld [vmem:[#allocation5] sm:$0xff]
    %v65 = vld [vmem:[#allocation5 + $0x8] sm:$0xff]
    %v66 = vld [vmem:[#allocation5 + $0x10] sm:$0xff]
    %v67 = vld [vmem:[#allocation5 + $0x18] sm:$0xff]
    %v68 = vld [vmem:[#allocation7] sm:$0xff]
    %v69 = vld [vmem:[#allocation7 + $0x8] sm:$0xff]
    %v70 = vld [vmem:[#allocation7 + $0x10] sm:$0xff]
    %v71 = vld [vmem:[#allocation7 + $0x18] sm:$0xff]
    %v72 = vld [vmem:[%s3] sm:$0x1]
    %v73 = vmul.f32 %v60, 0.17677669
    %v74 = vmul.f32 %v61, 0.17677669
    %v75 = vmul.f32 %v62, 0.17677669
    %v76 = vmul.f32 %v63, 0.17677669
    %v77 = vpack.c.bf16 %v73, %v73
    %v78 = vpack.c.bf16 %v74, %v74
    %v79 = vpack.c.bf16 %v75, %v75
    %v80 = vpack.c.bf16 %v76, %v76
    %v81 = vpack.c.bf16 %v64, %v64
    %v82 = vpack.c.bf16 %v65, %v65
    %v83 = vpack.c.bf16 %v66, %v66
    %v84 = vpack.c.bf16 %v67, %v67
    %v86 = vlaneseq
    %v87 = vshrl.u32 %v86, 7
    %v88 = vsub.s32 0, %v87
    %v89 = vrot.slane %v72, %v88
    %vm91 = vcmask 261120
    %v93 = vsel %vm91, %v77, 0
    %v96 = vsel %vm91, %v81, 0
    %98 = vmatprep.subr.bf16.mxu0 0
    %99 = vmatpush1.bf16.xpose.msra.mxu0 0
    %100 = vmatprep.subr.bf16.mxu0 0
    %101 = vmatpush1.bf16.xpose.msra.mxu0 0
    %102 = vmatprep.subr.bf16.mxu0 0
    %103 = vmatpush1.bf16.xpose.msra.mxu0 0
    %104 = vmatprep.subr.bf16.mxu0 0
    %105 = vmatpush1.bf16.xpose.msra.mxu0 0
    %106 = vmatprep.subr.bf16.mxu0 0
    %107 = vmatpush1.bf16.xpose.msra.mxu0 0
    %108 = vmatprep.subr.bf16.mxu0 0
    %109 = vmatpush1.bf16.xpose.msra.mxu0 0
    %110 = vmatprep.subr.bf16.mxu0 0
    %111 = vmatpush1.bf16.xpose.msra.mxu0 0
    %112 = vmatprep.subr.bf16.mxu0 0
    %113 = vmatpush1.bf16.xpose.msra.mxu0 %v96
    %114 = vmatprep.subr.bf16.mxu0 0
    %115 = vmatpush2.bf16.xpose.msra.mxu0 0
    %116 = vmatprep.subr.bf16.mxu0 0
    %117 = vmatpush2.bf16.xpose.msra.mxu0 0
    %118 = vmatprep.subr.bf16.mxu0 0
    %119 = vmatpush2.bf16.xpose.msra.mxu0 0
    %120 = vmatprep.subr.bf16.mxu0 0
    %121 = vmatpush2.bf16.xpose.msra.mxu0 0
    %122 = vmatprep.subr.bf16.mxu0 0
    %123 = vmatpush2.bf16.xpose.msra.mxu0 0
    %124 = vmatprep.subr.bf16.mxu0 0
    %125 = vmatpush2.bf16.xpose.msra.mxu0 0
    %126 = vmatprep.subr.bf16.mxu0 0
    %127 = vmatpush2.bf16.xpose.msra.mxu0 0
    %128 = vmatprep.subr.bf16.mxu0 0
    %129 = vmatpush2.bf16.xpose.msra.mxu0 0
    %130 = vmatprep.mubr.bf16.mxu0 0
    %131 = vmatmul.mubr.bf16.gmra.mxu0 %v93
    %v132 = vpop.f32.mrf.mxu0
    %v133 = vadd.f32 %v89, %v132
    %v134 = vpop.f32.mrf.mxu0
    %v135 = vpop.f32.mrf.mxu0
    %v136 = vpop.f32.mrf.mxu0
    %137 = vdwg.mxu0
    %v139 = vsel %vm91, %v78, 0
    %v142 = vsel %vm91, %v82, 0
    %144 = vmatprep.subr.bf16.mxu0 0
    %145 = vmatpush1.bf16.xpose.msra.mxu0 0
    %146 = vmatprep.subr.bf16.mxu0 0
    %147 = vmatpush1.bf16.xpose.msra.mxu0 0
    %148 = vmatprep.subr.bf16.mxu0 0
    %149 = vmatpush1.bf16.xpose.msra.mxu0 0
    %150 = vmatprep.subr.bf16.mxu0 0
    %151 = vmatpush1.bf16.xpose.msra.mxu0 0
    %152 = vmatprep.subr.bf16.mxu0 0
    %153 = vmatpush1.bf16.xpose.msra.mxu0 0
    %154 = vmatprep.subr.bf16.mxu0 0
    %155 = vmatpush1.bf16.xpose.msra.mxu0 0
    %156 = vmatprep.subr.bf16.mxu0 0
    %157 = vmatpush1.bf16.xpose.msra.mxu0 0
    %158 = vmatprep.subr.bf16.mxu0 0
    %159 = vmatpush1.bf16.xpose.msra.mxu0 %v142
    %160 = vmatprep.subr.bf16.mxu0 0
    %161 = vmatpush2.bf16.xpose.msra.mxu0 0
    %162 = vmatprep.subr.bf16.mxu0 0
    %163 = vmatpush2.bf16.xpose.msra.mxu0 0
    %164 = vmatprep.subr.bf16.mxu0 0
    %165 = vmatpush2.bf16.xpose.msra.mxu0 0
    %166 = vmatprep.subr.bf16.mxu0 0
    %167 = vmatpush2.bf16.xpose.msra.mxu0 0
    %168 = vmatprep.subr.bf16.mxu0 0
    %169 = vmatpush2.bf16.xpose.msra.mxu0 0
    %170 = vmatprep.subr.bf16.mxu0 0
    %171 = vmatpush2.bf16.xpose.msra.mxu0 0
    %172 = vmatprep.subr.bf16.mxu0 0
    %173 = vmatpush2.bf16.xpose.msra.mxu0 0
    %174 = vmatprep.subr.bf16.mxu0 0
    %175 = vmatpush2.bf16.xpose.msra.mxu0 0
    %176 = vmatprep.mubr.bf16.mxu0 0
    %177 = vmatmul.mubr.bf16.gmra.mxu0 %v139
    %v178 = vpop.f32.mrf.mxu0
    %v179 = vadd.f32 %v89, %v178
    %v180 = vpop.f32.mrf.mxu0
    %v181 = vpop.f32.mrf.mxu0
    %v182 = vpop.f32.mrf.mxu0
    %183 = vdwg.mxu0
    %v185 = vsel %vm91, %v79, 0
    %v188 = vsel %vm91, %v83, 0
    %190 = vmatprep.subr.bf16.mxu0 0
    %191 = vmatpush1.bf16.xpose.msra.mxu0 0
    %192 = vmatprep.subr.bf16.mxu0 0
    %193 = vmatpush1.bf16.xpose.msra.mxu0 0
    %194 = vmatprep.subr.bf16.mxu0 0
    %195 = vmatpush1.bf16.xpose.msra.mxu0 0
    %196 = vmatprep.subr.bf16.mxu0 0
    %197 = vmatpush1.bf16.xpose.msra.mxu0 0
    %198 = vmatprep.subr.bf16.mxu0 0
    %199 = vmatpush1.bf16.xpose.msra.mxu0 0
    %200 = vmatprep.subr.bf16.mxu0 0
    %201 = vmatpush1.bf16.xpose.msra.mxu0 0
    %202 = vmatprep.subr.bf16.mxu0 0
    %203 = vmatpush1.bf16.xpose.msra.mxu0 0
    %204 = vmatprep.subr.bf16.mxu0 0
    %205 = vmatpush1.bf16.xpose.msra.mxu0 %v188
    %206 = vmatprep.subr.bf16.mxu0 0
    %207 = vmatpush2.bf16.xpose.msra.mxu0 0
    %208 = vmatprep.subr.bf16.mxu0 0
    %209 = vmatpush2.bf16.xpose.msra.mxu0 0
    %210 = vmatprep.subr.bf16.mxu0 0
    %211 = vmatpush2.bf16.xpose.msra.mxu0 0
    %212 = vmatprep.subr.bf16.mxu0 0
    %213 = vmatpush2.bf16.xpose.msra.mxu0 0
    %214 = vmatprep.subr.bf16.mxu0 0
    %215 = vmatpush2.bf16.xpose.msra.mxu0 0
    %216 = vmatprep.subr.bf16.mxu0 0
    %217 = vmatpush2.bf16.xpose.msra.mxu0 0
    %218 = vmatprep.subr.bf16.mxu0 0
    %219 = vmatpush2.bf16.xpose.msra.mxu0 0
    %220 = vmatprep.subr.bf16.mxu0 0
    %221 = vmatpush2.bf16.xpose.msra.mxu0 0
    %222 = vmatprep.mubr.bf16.mxu0 0
    %223 = vmatmul.mubr.bf16.gmra.mxu0 %v185
    %v224 = vpop.f32.mrf.mxu0
    %v225 = vadd.f32 %v89, %v224
    %v226 = vpop.f32.mrf.mxu0
    %v227 = vpop.f32.mrf.mxu0
    %v228 = vpop.f32.mrf.mxu0
    %229 = vdwg.mxu0
    %v231 = vsel %vm91, %v80, 0
    %v234 = vsel %vm91, %v84, 0
    %236 = vmatprep.subr.bf16.mxu0 0
    %237 = vmatpush1.bf16.xpose.msra.mxu0 0
    %238 = vmatprep.subr.bf16.mxu0 0
    %239 = vmatpush1.bf16.xpose.msra.mxu0 0
    %240 = vmatprep.subr.bf16.mxu0 0
    %241 = vmatpush1.bf16.xpose.msra.mxu0 0
    %242 = vmatprep.subr.bf16.mxu0 0
    %243 = vmatpush1.bf16.xpose.msra.mxu0 0
    %244 = vmatprep.subr.bf16.mxu0 0
    %245 = vmatpush1.bf16.xpose.msra.mxu0 0
    %246 = vmatprep.subr.bf16.mxu0 0
    %247 = vmatpush1.bf16.xpose.msra.mxu0 0
    %248 = vmatprep.subr.bf16.mxu0 0
    %249 = vmatpush1.bf16.xpose.msra.mxu0 0
    %250 = vmatprep.subr.bf16.mxu0 0
    %251 = vmatpush1.bf16.xpose.msra.mxu0 %v234
    %252 = vmatprep.subr.bf16.mxu0 0
    %253 = vmatpush2.bf16.xpose.msra.mxu0 0
    %254 = vmatprep.subr.bf16.mxu0 0
    %255 = vmatpush2.bf16.xpose.msra.mxu0 0
    %256 = vmatprep.subr.bf16.mxu0 0
    %257 = vmatpush2.bf16.xpose.msra.mxu0 0
    %258 = vmatprep.subr.bf16.mxu0 0
    %259 = vmatpush2.bf16.xpose.msra.mxu0 0
    %260 = vmatprep.subr.bf16.mxu0 0
    %261 = vmatpush2.bf16.xpose.msra.mxu0 0
    %262 = vmatprep.subr.bf16.mxu0 0
    %263 = vmatpush2.bf16.xpose.msra.mxu0 0
    %264 = vmatprep.subr.bf16.mxu0 0
    %265 = vmatpush2.bf16.xpose.msra.mxu0 0
    %266 = vmatprep.subr.bf16.mxu0 0
    %267 = vmatpush2.bf16.xpose.msra.mxu0 0
    %268 = vmatprep.mubr.bf16.mxu0 0
    %269 = vmatmul.mubr.bf16.gmra.mxu0 %v231
    %v270 = vpop.f32.mrf.mxu0
    %v271 = vadd.f32 %v89, %v270
    %v272 = vpop.f32.mrf.mxu0
    %v273 = vpop.f32.mrf.mxu0
    %v274 = vpop.f32.mrf.mxu0
    %275 = vdwg.mxu0
    %vm276 = vcmask 64512
    %v277 = vsel %vm276, %v133, -inf
    %278 = vmax.xlane.f32.xlu0 %v277
    %v279 = vpop.xlane.xlu0 %278
    %v280 = vsel %vm276, %v179, -inf
    %281 = vmax.xlane.f32.xlu0 %v280
    %v282 = vpop.xlane.xlu0 %281
    %v283 = vsel %vm276, %v225, -inf
    %284 = vmax.xlane.f32.xlu0 %v283
    %v285 = vpop.xlane.xlu0 %284
    %v286 = vsel %vm276, %v271, -inf
    %287 = vmax.xlane.f32.xlu0 %v286
    %v288 = vpop.xlane.xlu0 %287
    %v289 = vsub.f32 %v133, %v279
    %v290 = vsub.f32 %v179, %v282
    %v291 = vsub.f32 %v225, %v285
    %v292 = vsub.f32 %v271, %v288
    %v293 = vmul.f32 %v289, 1.442695
    %v294 = vpow.pop %v293
    %v295 = vmul.f32 %v290, 1.442695
    %v296 = vpow.pop %v295
    %v297 = vmul.f32 %v291, 1.442695
    %v298 = vpow.pop %v297
    %v299 = vmul.f32 %v292, 1.442695
    %v300 = vpow.pop %v299
    %v301 = vsel %vm276, %v294, 0.0
    %302 = vadd.xlane.f32.xlu0 %v301
    %v303 = vpop.xlane.xlu0 %302
    %v304 = vsel %vm276, %v296, 0.0
    %305 = vadd.xlane.f32.xlu0 %v304
    %v306 = vpop.xlane.xlu0 %305
    %v307 = vsel %vm276, %v298, 0.0
    %308 = vadd.xlane.f32.xlu0 %v307
    %v309 = vpop.xlane.xlu0 %308
    %v310 = vsel %vm276, %v300, 0.0
    %311 = vadd.xlane.f32.xlu0 %v310
    %v312 = vpop.xlane.xlu0 %311
    %v313 = vrcp.pop %v303
    %v314 = vrcp.pop %v306
    %v315 = vrcp.pop %v309
    %v316 = vrcp.pop %v312
    %v317 = vmul.f32 %v294, %v313
    %v318 = vmul.f32 %v296, %v314
    %v319 = vmul.f32 %v298, %v315
    %v320 = vmul.f32 %v300, %v316
    %v321 = vpack.c.bf16 %v317, %v317
    %v322 = vpack.c.bf16 %v318, %v318
    %v323 = vpack.c.bf16 %v319, %v319
    %v324 = vpack.c.bf16 %v320, %v320
    %v325 = vpack.c.bf16 %v68, %v68
    %v326 = vpack.c.bf16 %v69, %v69
    %v327 = vpack.c.bf16 %v70, %v70
    %v328 = vpack.c.bf16 %v71, %v71
    %v330 = vsel %vm276, %v321, 0
    %vm332 = vcmask 1043456
    %v334 = vsel %vm332, %v325, 0
    %336 = vmatprep.subr.bf16.mxu0 0
    %337 = vmatpush1.bf16.msra.mxu0 0
    %338 = vmatprep.subr.bf16.mxu0 0
    %339 = vmatpush1.bf16.msra.mxu0 0
    %340 = vmatprep.subr.bf16.mxu0 0
    %341 = vmatpush1.bf16.msra.mxu0 0
    %342 = vmatprep.subr.bf16.mxu0 0
    %343 = vmatpush1.bf16.msra.mxu0 0
    %344 = vmatprep.subr.bf16.mxu0 0
    %345 = vmatpush1.bf16.msra.mxu0 0
    %346 = vmatprep.subr.bf16.mxu0 0
    %347 = vmatpush1.bf16.msra.mxu0 0
    %348 = vmatprep.subr.bf16.mxu0 0
    %349 = vmatpush1.bf16.msra.mxu0 0
    %350 = vmatprep.subr.bf16.mxu0 0
    %351 = vmatpush1.bf16.msra.mxu0 %v334
    %352 = vmatprep.subr.bf16.mxu0 0
    %353 = vmatpush2.bf16.msra.mxu0 0
    %354 = vmatprep.subr.bf16.mxu0 0
    %355 = vmatpush2.bf16.msra.mxu0 0
    %356 = vmatprep.subr.bf16.mxu0 0
    %357 = vmatpush2.bf16.msra.mxu0 0
    %358 = vmatprep.subr.bf16.mxu0 0
    %359 = vmatpush2.bf16.msra.mxu0 0
    %360 = vmatprep.subr.bf16.mxu0 0
    %361 = vmatpush2.bf16.msra.mxu0 0
    %362 = vmatprep.subr.bf16.mxu0 0
    %363 = vmatpush2.bf16.msra.mxu0 0
    %364 = vmatprep.subr.bf16.mxu0 0
    %365 = vmatpush2.bf16.msra.mxu0 0
    %366 = vmatprep.subr.bf16.mxu0 0
    %367 = vmatpush2.bf16.msra.mxu0 0
    %368 = vmatprep.mubr.bf16.mxu0 0
    %369 = vmatmul.mubr.bf16.gmra.mxu0 %v330
    %v370 = vpop.f32.mrf.mxu0
    %v371 = vadd.f32 0.0, %v370
    %v372 = vpop.f32.mrf.mxu0
    %v373 = vpop.f32.mrf.mxu0
    %v374 = vpop.f32.mrf.mxu0
    %375 = vdwg.mxu0
    %v377 = vsel %vm276, %v322, 0
    %v380 = vsel %vm332, %v326, 0
    %382 = vmatprep.subr.bf16.mxu0 0
    %383 = vmatpush1.bf16.msra.mxu0 0
    %384 = vmatprep.subr.bf16.mxu0 0
    %385 = vmatpush1.bf16.msra.mxu0 0
    %386 = vmatprep.subr.bf16.mxu0 0
    %387 = vmatpush1.bf16.msra.mxu0 0
    %388 = vmatprep.subr.bf16.mxu0 0
    %389 = vmatpush1.bf16.msra.mxu0 0
    %390 = vmatprep.subr.bf16.mxu0 0
    %391 = vmatpush1.bf16.msra.mxu0 0
    %392 = vmatprep.subr.bf16.mxu0 0
    %393 = vmatpush1.bf16.msra.mxu0 0
    %394 = vmatprep.subr.bf16.mxu0 0
    %395 = vmatpush1.bf16.msra.mxu0 0
    %396 = vmatprep.subr.bf16.mxu0 0
    %397 = vmatpush1.bf16.msra.mxu0 %v380
    %398 = vmatprep.subr.bf16.mxu0 0
    %399 = vmatpush2.bf16.msra.mxu0 0
    %400 = vmatprep.subr.bf16.mxu0 0
    %401 = vmatpush2.bf16.msra.mxu0 0
    %402 = vmatprep.subr.bf16.mxu0 0
    %403 = vmatpush2.bf16.msra.mxu0 0
    %404 = vmatprep.subr.bf16.mxu0 0
    %405 = vmatpush2.bf16.msra.mxu0 0
    %406 = vmatprep.subr.bf16.mxu0 0
    %407 = vmatpush2.bf16.msra.mxu0 0
    %408 = vmatprep.subr.bf16.mxu0 0
    %409 = vmatpush2.bf16.msra.mxu0 0
    %410 = vmatprep.subr.bf16.mxu0 0
    %411 = vmatpush2.bf16.msra.mxu0 0
    %412 = vmatprep.subr.bf16.mxu0 0
    %413 = vmatpush2.bf16.msra.mxu0 0
    %414 = vmatprep.mubr.bf16.mxu0 0
    %415 = vmatmul.mubr.bf16.gmra.mxu0 %v377
    %v416 = vpop.f32.mrf.mxu0
    %v417 = vadd.f32 0.0, %v416
    %v418 = vpop.f32.mrf.mxu0
    %v419 = vpop.f32.mrf.mxu0
    %v420 = vpop.f32.mrf.mxu0
    %421 = vdwg.mxu0
    %v423 = vsel %vm276, %v323, 0
    %v426 = vsel %vm332, %v327, 0
    %428 = vmatprep.subr.bf16.mxu0 0
    %429 = vmatpush1.bf16.msra.mxu0 0
    %430 = vmatprep.subr.bf16.mxu0 0
    %431 = vmatpush1.bf16.msra.mxu0 0
    %432 = vmatprep.subr.bf16.mxu0 0
    %433 = vmatpush1.bf16.msra.mxu0 0
    %434 = vmatprep.subr.bf16.mxu0 0
    %435 = vmatpush1.bf16.msra.mxu0 0
    %436 = vmatprep.subr.bf16.mxu0 0
    %437 = vmatpush1.bf16.msra.mxu0 0
    %438 = vmatprep.subr.bf16.mxu0 0
    %439 = vmatpush1.bf16.msra.mxu0 0
    %440 = vmatprep.subr.bf16.mxu0 0
    %441 = vmatpush1.bf16.msra.mxu0 0
    %442 = vmatprep.subr.bf16.mxu0 0
    %443 = vmatpush1.bf16.msra.mxu0 %v426
    %444 = vmatprep.subr.bf16.mxu0 0
    %445 = vmatpush2.bf16.msra.mxu0 0
    %446 = vmatprep.subr.bf16.mxu0 0
    %447 = vmatpush2.bf16.msra.mxu0 0
    %448 = vmatprep.subr.bf16.mxu0 0
    %449 = vmatpush2.bf16.msra.mxu0 0
    %450 = vmatprep.subr.bf16.mxu0 0
    %451 = vmatpush2.bf16.msra.mxu0 0
    %452 = vmatprep.subr.bf16.mxu0 0
    %453 = vmatpush2.bf16.msra.mxu0 0
    %454 = vmatprep.subr.bf16.mxu0 0
    %455 = vmatpush2.bf16.msra.mxu0 0
    %456 = vmatprep.subr.bf16.mxu0 0
    %457 = vmatpush2.bf16.msra.mxu0 0
    %458 = vmatprep.subr.bf16.mxu0 0
    %459 = vmatpush2.bf16.msra.mxu0 0
    %460 = vmatprep.mubr.bf16.mxu0 0
    %461 = vmatmul.mubr.bf16.gmra.mxu0 %v423
    %v462 = vpop.f32.mrf.mxu0
    %v463 = vadd.f32 0.0, %v462
    %v464 = vpop.f32.mrf.mxu0
    %v465 = vpop.f32.mrf.mxu0
    %v466 = vpop.f32.mrf.mxu0
    %467 = vdwg.mxu0
    %v469 = vsel %vm276, %v324, 0
    %v472 = vsel %vm332, %v328, 0
    %474 = vmatprep.subr.bf16.mxu0 0
    %475 = vmatpush1.bf16.msra.mxu0 0
    %476 = vmatprep.subr.bf16.mxu0 0
    %477 = vmatpush1.bf16.msra.mxu0 0
    %478 = vmatprep.subr.bf16.mxu0 0
    %479 = vmatpush1.bf16.msra.mxu0 0
    %480 = vmatprep.subr.bf16.mxu0 0
    %481 = vmatpush1.bf16.msra.mxu0 0
    %482 = vmatprep.subr.bf16.mxu0 0
    %483 = vmatpush1.bf16.msra.mxu0 0
    %484 = vmatprep.subr.bf16.mxu0 0
    %485 = vmatpush1.bf16.msra.mxu0 0
    %486 = vmatprep.subr.bf16.mxu0 0
    %487 = vmatpush1.bf16.msra.mxu0 0
    %488 = vmatprep.subr.bf16.mxu0 0
    %489 = vmatpush1.bf16.msra.mxu0 %v472
    %490 = vmatprep.subr.bf16.mxu0 0
    %491 = vmatpush2.bf16.msra.mxu0 0
    %492 = vmatprep.subr.bf16.mxu0 0
    %493 = vmatpush2.bf16.msra.mxu0 0
    %494 = vmatprep.subr.bf16.mxu0 0
    %495 = vmatpush2.bf16.msra.mxu0 0
    %496 = vmatprep.subr.bf16.mxu0 0
    %497 = vmatpush2.bf16.msra.mxu0 0
    %498 = vmatprep.subr.bf16.mxu0 0
    %499 = vmatpush2.bf16.msra.mxu0 0
    %500 = vmatprep.subr.bf16.mxu0 0
    %501 = vmatpush2.bf16.msra.mxu0 0
    %502 = vmatprep.subr.bf16.mxu0 0
    %503 = vmatpush2.bf16.msra.mxu0 0
    %504 = vmatprep.subr.bf16.mxu0 0
    %505 = vmatpush2.bf16.msra.mxu0 0
    %506 = vmatprep.mubr.bf16.mxu0 0
    %507 = vmatmul.mubr.bf16.gmra.mxu0 %v469
    %v508 = vpop.f32.mrf.mxu0
    %v509 = vadd.f32 0.0, %v508
    %v510 = vpop.f32.mrf.mxu0
    %v511 = vpop.f32.mrf.mxu0
    %v512 = vpop.f32.mrf.mxu0
    %513 = vdwg.mxu0
    %514 = vst.msk [vmem:[#allocation8] sm:$0xff] %vm91, %v371
    %515 = vst.msk [vmem:[#allocation8 + $0x8] sm:$0xff] %vm91, %v417
    %516 = vst.msk [vmem:[#allocation8 + $0x10] sm:$0xff] %vm91, %v463
    %517 = vst.msk [vmem:[#allocation8 + $0x18] sm:$0xff] %vm91, %v509
    %s518 = scalar_lea.vmem [#allocation2], 32
    %v519 = vld [vmem:[%s518] sm:$0xff]
    %v520 = vld [vmem:[%s518 + $0x8] sm:$0xff]
    %v521 = vld [vmem:[%s518 + $0x10] sm:$0xff]
    %v522 = vld [vmem:[%s518 + $0x18] sm:$0xff]
    %s523 = scalar_lea.vmem [#allocation5], 32
    %v524 = vld [vmem:[%s523] sm:$0xff]
    %v525 = vld [vmem:[%s523 + $0x8] sm:$0xff]
    %v526 = vld [vmem:[%s523 + $0x10] sm:$0xff]
    %v527 = vld [vmem:[%s523 + $0x18] sm:$0xff]
    %s528 = scalar_lea.vmem [#allocation7], 32
    %v529 = vld [vmem:[%s528] sm:$0xff]
    %v530 = vld [vmem:[%s528 + $0x8] sm:$0xff]
    %v531 = vld [vmem:[%s528 + $0x10] sm:$0xff]
    %v532 = vld [vmem:[%s528 + $0x18] sm:$0xff]
    %s533 = scalar_lea.vmem %s3, 1
    %v534 = vld [vmem:[%s533] sm:$0x1]
    %v535 = vmul.f32 %v519, 0.17677669
    %v536 = vmul.f32 %v520, 0.17677669
    %v537 = vmul.f32 %v521, 0.17677669
    %v538 = vmul.f32 %v522, 0.17677669
    %v539 = vpack.c.bf16 %v535, %v535
    %v540 = vpack.c.bf16 %v536, %v536
    %v541 = vpack.c.bf16 %v537, %v537
    %v542 = vpack.c.bf16 %v538, %v538
    %v543 = vpack.c.bf16 %v524, %v524
    %v544 = vpack.c.bf16 %v525, %v525
    %v545 = vpack.c.bf16 %v526, %v526
    %v546 = vpack.c.bf16 %v527, %v527
    %v548 = vlaneseq
    %v549 = vshrl.u32 %v548, 7
    %v550 = vsub.s32 0, %v549
    %v551 = vrot.slane %v534, %v550
    %v554 = vsel %vm91, %v539, 0
    %v557 = vsel %vm91, %v543, 0
    %559 = vmatprep.subr.bf16.mxu0 0
    %560 = vmatpush1.bf16.xpose.msra.mxu0 0
    %561 = vmatprep.subr.bf16.mxu0 0
    %562 = vmatpush1.bf16.xpose.msra.mxu0 0
    %563 = vmatprep.subr.bf16.mxu0 0
    %564 = vmatpush1.bf16.xpose.msra.mxu0 0
    %565 = vmatprep.subr.bf16.mxu0 0
    %566 = vmatpush1.bf16.xpose.msra.mxu0 0
    %567 = vmatprep.subr.bf16.mxu0 0
    %568 = vmatpush1.bf16.xpose.msra.mxu0 0
    %569 = vmatprep.subr.bf16.mxu0 0
    %570 = vmatpush1.bf16.xpose.msra.mxu0 0
    %571 = vmatprep.subr.bf16.mxu0 0
    %572 = vmatpush1.bf16.xpose.msra.mxu0 0
    %573 = vmatprep.subr.bf16.mxu0 0
    %574 = vmatpush1.bf16.xpose.msra.mxu0 %v557
    %575 = vmatprep.subr.bf16.mxu0 0
    %576 = vmatpush2.bf16.xpose.msra.mxu0 0
    %577 = vmatprep.subr.bf16.mxu0 0
    %578 = vmatpush2.bf16.xpose.msra.mxu0 0
    %579 = vmatprep.subr.bf16.mxu0 0
    %580 = vmatpush2.bf16.xpose.msra.mxu0 0
    %581 = vmatprep.subr.bf16.mxu0 0
    %582 = vmatpush2.bf16.xpose.msra.mxu0 0
    %583 = vmatprep.subr.bf16.mxu0 0
    %584 = vmatpush2.bf16.xpose.msra.mxu0 0
    %585 = vmatprep.subr.bf16.mxu0 0
    %586 = vmatpush2.bf16.xpose.msra.mxu0 0
    %587 = vmatprep.subr.bf16.mxu0 0
    %588 = vmatpush2.bf16.xpose.msra.mxu0 0
    %589 = vmatprep.subr.bf16.mxu0 0
    %590 = vmatpush2.bf16.xpose.msra.mxu0 0
    %591 = vmatprep.mubr.bf16.mxu0 0
    %592 = vmatmul.mubr.bf16.gmra.mxu0 %v554
    %v593 = vpop.f32.mrf.mxu0
    %v594 = vadd.f32 %v551, %v593
    %v595 = vpop.f32.mrf.mxu0
    %v596 = vpop.f32.mrf.mxu0
    %v597 = vpop.f32.mrf.mxu0
    %598 = vdwg.mxu0
    %v600 = vsel %vm91, %v540, 0
    %v603 = vsel %vm91, %v544, 0
    %605 = vmatprep.subr.bf16.mxu0 0
    %606 = vmatpush1.bf16.xpose.msra.mxu0 0
    %607 = vmatprep.subr.bf16.mxu0 0
    %608 = vmatpush1.bf16.xpose.msra.mxu0 0
    %609 = vmatprep.subr.bf16.mxu0 0
    %610 = vmatpush1.bf16.xpose.msra.mxu0 0
    %611 = vmatprep.subr.bf16.mxu0 0
    %612 = vmatpush1.bf16.xpose.msra.mxu0 0
    %613 = vmatprep.subr.bf16.mxu0 0
    %614 = vmatpush1.bf16.xpose.msra.mxu0 0
    %615 = vmatprep.subr.bf16.mxu0 0
    %616 = vmatpush1.bf16.xpose.msra.mxu0 0
    %617 = vmatprep.subr.bf16.mxu0 0
    %618 = vmatpush1.bf16.xpose.msra.mxu0 0
    %619 = vmatprep.subr.bf16.mxu0 0
    %620 = vmatpush1.bf16.xpose.msra.mxu0 %v603
    %621 = vmatprep.subr.bf16.mxu0 0
    %622 = vmatpush2.bf16.xpose.msra.mxu0 0
    %623 = vmatprep.subr.bf16.mxu0 0
    %624 = vmatpush2.bf16.xpose.msra.mxu0 0
    %625 = vmatprep.subr.bf16.mxu0 0
    %626 = vmatpush2.bf16.xpose.msra.mxu0 0
    %627 = vmatprep.subr.bf16.mxu0 0
    %628 = vmatpush2.bf16.xpose.msra.mxu0 0
    %629 = vmatprep.subr.bf16.mxu0 0
    %630 = vmatpush2.bf16.xpose.msra.mxu0 0
    %631 = vmatprep.subr.bf16.mxu0 0
    %632 = vmatpush2.bf16.xpose.msra.mxu0 0
    %633 = vmatprep.subr.bf16.mxu0 0
    %634 = vmatpush2.bf16.xpose.msra.mxu0 0
    %635 = vmatprep.subr.bf16.mxu0 0
    %636 = vmatpush2.bf16.xpose.msra.mxu0 0
    %637 = vmatprep.mubr.bf16.mxu0 0
    %638 = vmatmul.mubr.bf16.gmra.mxu0 %v600
    %v639 = vpop.f32.mrf.mxu0
    %v640 = vadd.f32 %v551, %v639
    %v641 = vpop.f32.mrf.mxu0
    %v642 = vpop.f32.mrf.mxu0
    %v643 = vpop.f32.mrf.mxu0
    %644 = vdwg.mxu0
    %v646 = vsel %vm91, %v541, 0
    %v649 = vsel %vm91, %v545, 0
    %651 = vmatprep.subr.bf16.mxu0 0
    %652 = vmatpush1.bf16.xpose.msra.mxu0 0
    %653 = vmatprep.subr.bf16.mxu0 0
    %654 = vmatpush1.bf16.xpose.msra.mxu0 0
    %655 = vmatprep.subr.bf16.mxu0 0
    %656 = vmatpush1.bf16.xpose.msra.mxu0 0
    %657 = vmatprep.subr.bf16.mxu0 0
    %658 = vmatpush1.bf16.xpose.msra.mxu0 0
    %659 = vmatprep.subr.bf16.mxu0 0
    %660 = vmatpush1.bf16.xpose.msra.mxu0 0
    %661 = vmatprep.subr.bf16.mxu0 0
    %662 = vmatpush1.bf16.xpose.msra.mxu0 0
    %663 = vmatprep.subr.bf16.mxu0 0
    %664 = vmatpush1.bf16.xpose.msra.mxu0 0
    %665 = vmatprep.subr.bf16.mxu0 0
    %666 = vmatpush1.bf16.xpose.msra.mxu0 %v649
    %667 = vmatprep.subr.bf16.mxu0 0
    %668 = vmatpush2.bf16.xpose.msra.mxu0 0
    %669 = vmatprep.subr.bf16.mxu0 0
    %670 = vmatpush2.bf16.xpose.msra.mxu0 0
    %671 = vmatprep.subr.bf16.mxu0 0
    %672 = vmatpush2.bf16.xpose.msra.mxu0 0
    %673 = vmatprep.subr.bf16.mxu0 0
    %674 = vmatpush2.bf16.xpose.msra.mxu0 0
    %675 = vmatprep.subr.bf16.mxu0 0
    %676 = vmatpush2.bf16.xpose.msra.mxu0 0
    %677 = vmatprep.subr.bf16.mxu0 0
    %678 = vmatpush2.bf16.xpose.msra.mxu0 0
    %679 = vmatprep.subr.bf16.mxu0 0
    %680 = vmatpush2.bf16.xpose.msra.mxu0 0
    %681 = vmatprep.subr.bf16.mxu0 0
    %682 = vmatpush2.bf16.xpose.msra.mxu0 0
    %683 = vmatprep.mubr.bf16.mxu0 0
    %684 = vmatmul.mubr.bf16.gmra.mxu0 %v646
    %v685 = vpop.f32.mrf.mxu0
    %v686 = vadd.f32 %v551, %v685
    %v687 = vpop.f32.mrf.mxu0
    %v688 = vpop.f32.mrf.mxu0
    %v689 = vpop.f32.mrf.mxu0
    %690 = vdwg.mxu0
    %v692 = vsel %vm91, %v542, 0
    %v695 = vsel %vm91, %v546, 0
    %697 = vmatprep.subr.bf16.mxu0 0
    %698 = vmatpush1.bf16.xpose.msra.mxu0 0
    %699 = vmatprep.subr.bf16.mxu0 0
    %700 = vmatpush1.bf16.xpose.msra.mxu0 0
    %701 = vmatprep.subr.bf16.mxu0 0
    %702 = vmatpush1.bf16.xpose.msra.mxu0 0
    %703 = vmatprep.subr.bf16.mxu0 0
    %704 = vmatpush1.bf16.xpose.msra.mxu0 0
    %705 = vmatprep.subr.bf16.mxu0 0
    %706 = vmatpush1.bf16.xpose.msra.mxu0 0
    %707 = vmatprep.subr.bf16.mxu0 0
    %708 = vmatpush1.bf16.xpose.msra.mxu0 0
    %709 = vmatprep.subr.bf16.mxu0 0
    %710 = vmatpush1.bf16.xpose.msra.mxu0 0
    %711 = vmatprep.subr.bf16.mxu0 0
    %712 = vmatpush1.bf16.xpose.msra.mxu0 %v695
    %713 = vmatprep.subr.bf16.mxu0 0
    %714 = vmatpush2.bf16.xpose.msra.mxu0 0
    %715 = vmatprep.subr.bf16.mxu0 0
    %716 = vmatpush2.bf16.xpose.msra.mxu0 0
    %717 = vmatprep.subr.bf16.mxu0 0
    %718 = vmatpush2.bf16.xpose.msra.mxu0 0
    %719 = vmatprep.subr.bf16.mxu0 0
    %720 = vmatpush2.bf16.xpose.msra.mxu0 0
    %721 = vmatprep.subr.bf16.mxu0 0
    %722 = vmatpush2.bf16.xpose.msra.mxu0 0
    %723 = vmatprep.subr.bf16.mxu0 0
    %724 = vmatpush2.bf16.xpose.msra.mxu0 0
    %725 = vmatprep.subr.bf16.mxu0 0
    %726 = vmatpush2.bf16.xpose.msra.mxu0 0
    %727 = vmatprep.subr.bf16.mxu0 0
    %728 = vmatpush2.bf16.xpose.msra.mxu0 0
    %729 = vmatprep.mubr.bf16.mxu0 0
    %730 = vmatmul.mubr.bf16.gmra.mxu0 %v692
    %v731 = vpop.f32.mrf.mxu0
    %v732 = vadd.f32 %v551, %v731
    %v733 = vpop.f32.mrf.mxu0
    %v734 = vpop.f32.mrf.mxu0
    %v735 = vpop.f32.mrf.mxu0
    %736 = vdwg.mxu0
    %v737 = vsel %vm276, %v594, -inf
    %738 = vmax.xlane.f32.xlu0 %v737
    %v739 = vpop.xlane.xlu0 %738
    %v740 = vsel %vm276, %v640, -inf
    %741 = vmax.xlane.f32.xlu0 %v740
    %v742 = vpop.xlane.xlu0 %741
    %v743 = vsel %vm276, %v686, -inf
    %744 = vmax.xlane.f32.xlu0 %v743
    %v745 = vpop.xlane.xlu0 %744
    %v746 = vsel %vm276, %v732, -inf
    %747 = vmax.xlane.f32.xlu0 %v746
    %v748 = vpop.xlane.xlu0 %747
    %v749 = vsub.f32 %v594, %v739
    %v750 = vsub.f32 %v640, %v742
    %v751 = vsub.f32 %v686, %v745
    %v752 = vsub.f32 %v732, %v748
    %v753 = vmul.f32 %v749, 1.442695
    %v754 = vpow.pop %v753
    %v755 = vmul.f32 %v750, 1.442695
    %v756 = vpow.pop %v755
    %v757 = vmul.f32 %v751, 1.442695
    %v758 = vpow.pop %v757
    %v759 = vmul.f32 %v752, 1.442695
    %v760 = vpow.pop %v759
    %v761 = vsel %vm276, %v754, 0.0
    %762 = vadd.xlane.f32.xlu0 %v761
    %v763 = vpop.xlane.xlu0 %762
    %v764 = vsel %vm276, %v756, 0.0
    %765 = vadd.xlane.f32.xlu0 %v764
    %v766 = vpop.xlane.xlu0 %765
    %v767 = vsel %vm276, %v758, 0.0
    %768 = vadd.xlane.f32.xlu0 %v767
    %v769 = vpop.xlane.xlu0 %768
    %v770 = vsel %vm276, %v760, 0.0
    %771 = vadd.xlane.f32.xlu0 %v770
    %v772 = vpop.xlane.xlu0 %771
    %v773 = vrcp.pop %v763
    %v774 = vrcp.pop %v766
    %v775 = vrcp.pop %v769
    %v776 = vrcp.pop %v772
    %v777 = vmul.f32 %v754, %v773
    %v778 = vmul.f32 %v756, %v774
    %v779 = vmul.f32 %v758, %v775
    %v780 = vmul.f32 %v760, %v776
    %v781 = vpack.c.bf16 %v777, %v777
    %v782 = vpack.c.bf16 %v778, %v778
    %v783 = vpack.c.bf16 %v779, %v779
    %v784 = vpack.c.bf16 %v780, %v780
    %v785 = vpack.c.bf16 %v529, %v529
    %v786 = vpack.c.bf16 %v530, %v530
    %v787 = vpack.c.bf16 %v531, %v531
    %v788 = vpack.c.bf16 %v532, %v532
    %v790 = vsel %vm276, %v781, 0
    %v793 = vsel %vm332, %v785, 0
    %795 = vmatprep.subr.bf16.mxu0 0
    %796 = vmatpush1.bf16.msra.mxu0 0
    %797 = vmatprep.subr.bf16.mxu0 0
    %798 = vmatpush1.bf16.msra.mxu0 0
    %799 = vmatprep.subr.bf16.mxu0 0
    %800 = vmatpush1.bf16.msra.mxu0 0
    %801 = vmatprep.subr.bf16.mxu0 0
    %802 = vmatpush1.bf16.msra.mxu0 0
    %803 = vmatprep.subr.bf16.mxu0 0
    %804 = vmatpush1.bf16.msra.mxu0 0
    %805 = vmatprep.subr.bf16.mxu0 0
    %806 = vmatpush1.bf16.msra.mxu0 0
    %807 = vmatprep.subr.bf16.mxu0 0
    %808 = vmatpush1.bf16.msra.mxu0 0
    %809 = vmatprep.subr.bf16.mxu0 0
    %810 = vmatpush1.bf16.msra.mxu0 %v793
    %811 = vmatprep.subr.bf16.mxu0 0
    %812 = vmatpush2.bf16.msra.mxu0 0
    %813 = vmatprep.subr.bf16.mxu0 0
    %814 = vmatpush2.bf16.msra.mxu0 0
    %815 = vmatprep.subr.bf16.mxu0 0
    %816 = vmatpush2.bf16.msra.mxu0 0
    %817 = vmatprep.subr.bf16.mxu0 0
    %818 = vmatpush2.bf16.msra.mxu0 0
    %819 = vmatprep.subr.bf16.mxu0 0
    %820 = vmatpush2.bf16.msra.mxu0 0
    %821 = vmatprep.subr.bf16.mxu0 0
    %822 = vmatpush2.bf16.msra.mxu0 0
    %823 = vmatprep.subr.bf16.mxu0 0
    %824 = vmatpush2.bf16.msra.mxu0 0
    %825 = vmatprep.subr.bf16.mxu0 0
    %826 = vmatpush2.bf16.msra.mxu0 0
    %827 = vmatprep.mubr.bf16.mxu0 0
    %828 = vmatmul.mubr.bf16.gmra.mxu0 %v790
    %v829 = vpop.f32.mrf.mxu0
    %v830 = vadd.f32 0.0, %v829
    %v831 = vpop.f32.mrf.mxu0
    %v832 = vpop.f32.mrf.mxu0
    %v833 = vpop.f32.mrf.mxu0
    %834 = vdwg.mxu0
    %v836 = vsel %vm276, %v782, 0
    %v839 = vsel %vm332, %v786, 0
    %841 = vmatprep.subr.bf16.mxu0 0
    %842 = vmatpush1.bf16.msra.mxu0 0
    %843 = vmatprep.subr.bf16.mxu0 0
    %844 = vmatpush1.bf16.msra.mxu0 0
    %845 = vmatprep.subr.bf16.mxu0 0
    %846 = vmatpush1.bf16.msra.mxu0 0
    %847 = vmatprep.subr.bf16.mxu0 0
    %848 = vmatpush1.bf16.msra.mxu0 0
    %849 = vmatprep.subr.bf16.mxu0 0
    %850 = vmatpush1.bf16.msra.mxu0 0
    %851 = vmatprep.subr.bf16.mxu0 0
    %852 = vmatpush1.bf16.msra.mxu0 0
    %853 = vmatprep.subr.bf16.mxu0 0
    %854 = vmatpush1.bf16.msra.mxu0 0
    %855 = vmatprep.subr.bf16.mxu0 0
    %856 = vmatpush1.bf16.msra.mxu0 %v839
    %857 = vmatprep.subr.bf16.mxu0 0
    %858 = vmatpush2.bf16.msra.mxu0 0
    %859 = vmatprep.subr.bf16.mxu0 0
    %860 = vmatpush2.bf16.msra.mxu0 0
    %861 = vmatprep.subr.bf16.mxu0 0
    %862 = vmatpush2.bf16.msra.mxu0 0
    %863 = vmatprep.subr.bf16.mxu0 0
    %864 = vmatpush2.bf16.msra.mxu0 0
    %865 = vmatprep.subr.bf16.mxu0 0
    %866 = vmatpush2.bf16.msra.mxu0 0
    %867 = vmatprep.subr.bf16.mxu0 0
    %868 = vmatpush2.bf16.msra.mxu0 0
    %869 = vmatprep.subr.bf16.mxu0 0
    %870 = vmatpush2.bf16.msra.mxu0 0
    %871 = vmatprep.subr.bf16.mxu0 0
    %872 = vmatpush2.bf16.msra.mxu0 0
    %873 = vmatprep.mubr.bf16.mxu0 0
    %874 = vmatmul.mubr.bf16.gmra.mxu0 %v836
    %v875 = vpop.f32.mrf.mxu0
    %v876 = vadd.f32 0.0, %v875
    %v877 = vpop.f32.mrf.mxu0
    %v878 = vpop.f32.mrf.mxu0
    %v879 = vpop.f32.mrf.mxu0
    %880 = vdwg.mxu0
    %v882 = vsel %vm276, %v783, 0
    %v885 = vsel %vm332, %v787, 0
    %887 = vmatprep.subr.bf16.mxu0 0
    %888 = vmatpush1.bf16.msra.mxu0 0
    %889 = vmatprep.subr.bf16.mxu0 0
    %890 = vmatpush1.bf16.msra.mxu0 0
    %891 = vmatprep.subr.bf16.mxu0 0
    %892 = vmatpush1.bf16.msra.mxu0 0
    %893 = vmatprep.subr.bf16.mxu0 0
    %894 = vmatpush1.bf16.msra.mxu0 0
    %895 = vmatprep.subr.bf16.mxu0 0
    %896 = vmatpush1.bf16.msra.mxu0 0
    %897 = vmatprep.subr.bf16.mxu0 0
    %898 = vmatpush1.bf16.msra.mxu0 0
    %899 = vmatprep.subr.bf16.mxu0 0
    %900 = vmatpush1.bf16.msra.mxu0 0
    %901 = vmatprep.subr.bf16.mxu0 0
    %902 = vmatpush1.bf16.msra.mxu0 %v885
    %903 = vmatprep.subr.bf16.mxu0 0
    %904 = vmatpush2.bf16.msra.mxu0 0
    %905 = vmatprep.subr.bf16.mxu0 0
    %906 = vmatpush2.bf16.msra.mxu0 0
    %907 = vmatprep.subr.bf16.mxu0 0
    %908 = vmatpush2.bf16.msra.mxu0 0
    %909 = vmatprep.subr.bf16.mxu0 0
    %910 = vmatpush2.bf16.msra.mxu0 0
    %911 = vmatprep.subr.bf16.mxu0 0
    %912 = vmatpush2.bf16.msra.mxu0 0
    %913 = vmatprep.subr.bf16.mxu0 0
    %914 = vmatpush2.bf16.msra.mxu0 0
    %915 = vmatprep.subr.bf16.mxu0 0
    %916 = vmatpush2.bf16.msra.mxu0 0
    %917 = vmatprep.subr.bf16.mxu0 0
    %918 = vmatpush2.bf16.msra.mxu0 0
    %919 = vmatprep.mubr.bf16.mxu0 0
    %920 = vmatmul.mubr.bf16.gmra.mxu0 %v882
    %v921 = vpop.f32.mrf.mxu0
    %v922 = vadd.f32 0.0, %v921
    %v923 = vpop.f32.mrf.mxu0
    %v924 = vpop.f32.mrf.mxu0
    %v925 = vpop.f32.mrf.mxu0
    %926 = vdwg.mxu0
    %v928 = vsel %vm276, %v784, 0
    %v931 = vsel %vm332, %v788, 0
    %933 = vmatprep.subr.bf16.mxu0 0
    %934 = vmatpush1.bf16.msra.mxu0 0
    %935 = vmatprep.subr.bf16.mxu0 0
    %936 = vmatpush1.bf16.msra.mxu0 0
    %937 = vmatprep.subr.bf16.mxu0 0
    %938 = vmatpush1.bf16.msra.mxu0 0
    %939 = vmatprep.subr.bf16.mxu0 0
    %940 = vmatpush1.bf16.msra.mxu0 0
    %941 = vmatprep.subr.bf16.mxu0 0
    %942 = vmatpush1.bf16.msra.mxu0 0
    %943 = vmatprep.subr.bf16.mxu0 0
    %944 = vmatpush1.bf16.msra.mxu0 0
    %945 = vmatprep.subr.bf16.mxu0 0
    %946 = vmatpush1.bf16.msra.mxu0 0
    %947 = vmatprep.subr.bf16.mxu0 0
    %948 = vmatpush1.bf16.msra.mxu0 %v931
    %949 = vmatprep.subr.bf16.mxu0 0
    %950 = vmatpush2.bf16.msra.mxu0 0
    %951 = vmatprep.subr.bf16.mxu0 0
    %952 = vmatpush2.bf16.msra.mxu0 0
    %953 = vmatprep.subr.bf16.mxu0 0
    %954 = vmatpush2.bf16.msra.mxu0 0
    %955 = vmatprep.subr.bf16.mxu0 0
    %956 = vmatpush2.bf16.msra.mxu0 0
    %957 = vmatprep.subr.bf16.mxu0 0
    %958 = vmatpush2.bf16.msra.mxu0 0
    %959 = vmatprep.subr.bf16.mxu0 0
    %960 = vmatpush2.bf16.msra.mxu0 0
    %961 = vmatprep.subr.bf16.mxu0 0
    %962 = vmatpush2.bf16.msra.mxu0 0
    %963 = vmatprep.subr.bf16.mxu0 0
    %964 = vmatpush2.bf16.msra.mxu0 0
    %965 = vmatprep.mubr.bf16.mxu0 0
    %966 = vmatmul.mubr.bf16.gmra.mxu0 %v928
    %v967 = vpop.f32.mrf.mxu0
    %v968 = vadd.f32 0.0, %v967
    %v969 = vpop.f32.mrf.mxu0
    %v970 = vpop.f32.mrf.mxu0
    %v971 = vpop.f32.mrf.mxu0
    %972 = vdwg.mxu0
    %s973 = scalar_lea.vmem [#allocation8], 32
    %974 = vst.msk [vmem:[%s973] sm:$0xff] %vm91, %v830
    %975 = vst.msk [vmem:[%s973 + $0x8] sm:$0xff] %vm91, %v876
    %976 = vst.msk [vmem:[%s973 + $0x10] sm:$0xff] %vm91, %v922
    %977 = vst.msk [vmem:[%s973 + $0x18] sm:$0xff] %vm91, %v968
    // Predicated region
    $region30: #{lsg_self_attention.1} parent=1 // pred_check
      _
    $region31: #{lsg_self_attention.1} parent=1 // pred_check_branch
      %979 = sbr.rel (0) target = $region33
    $region32: #{lsg_self_attention.1} parent=1 // pred_region
      %s981 = ssub.s32 1024, 1024
      %982 = vsyncadd [#allocation4], %s981
      %s983 = sshll.u32 [#allocation8], 4
      %s984 = int_to_ptr.vmem [resolvable:$true] %s983
      %989 = dma.vmem_to_hbm [thread:$0]  %s984, 1024, %s4, [#allocation4], 128, 128, 8
    $region33: #{lsg_self_attention.1} parent=1 // pred_fallthru
      _
    // Predicated region
    $region34: #{lsg_self_attention.1} parent=1 // pred_check
      _
    $region35: #{lsg_self_attention.1} parent=1 // pred_check_branch
      %991 = sbr.rel (0) target = $region37
    $region36: #{lsg_self_attention.1} parent=1 // pred_region
      %992 = dma.done [#allocation4], 1024
    $region37: #{lsg_self_attention.1} parent=1 // pred_fallthru
      _
    %993 = vsyncpa [#allocation3], 1
    %994 = vsyncpa [#allocation6], 1
    %995 = vsyncpa [#allocation4], 1

</llo_original>
